<compile_context>
chip_gen: v5e
topology: v5e:2x2
jax: 0.10.0
libtpu: 0.0.40
codegen_flags: <defaults>
</compile_context>

<pallas_src>
import functools

import jax
import jax.numpy as jnp
from jax.experimental import pallas as pl
from jax.experimental.pallas import tpu as pltpu

INPUT_SIZE = 1
HIDDEN = 32
OUTPUT_SIZE = 4


def qnetwork_kernel(x_ref, w1_ref, b1_ref, w2_ref, b2_ref, w3_ref, b3_ref, o_ref):
    # x_ref:  (1, TB)          batch on lanes
    # w1_ref: (32, 1), b1_ref: (32, 1)
    # w2_ref: (32, 32), b2_ref: (32, 1)
    # w3_ref: (4, 32),  b3_ref: (4, 1)
    # o_ref:  (4, TB)
    x = x_ref[...]
    # fc1 + relu: K=1 contraction -> lane-dense VPU outer product, skip the MXU.
    h1 = jnp.maximum(w1_ref[...] * x + b1_ref[...], 0.0)          # (32, TB)
    # fc2 + relu: MXU, N = TB lane-dense result, f32 accumulation.
    h2 = jnp.dot(w2_ref[...], h1, preferred_element_type=jnp.float32)
    h2 = jnp.maximum(h2 + b2_ref[...], 0.0)                        # (32, TB)
    # fc3 (no activation): lane-dense (4, TB) result -> unmasked stores.
    o_ref[...] = (
        jnp.dot(w3_ref[...], h2, preferred_element_type=jnp.float32) + b3_ref[...]
    )


def _round_up(n, m):
    return ((n + m - 1) // m) * m


def _choose_tiling(B, tb):
    """Balanced lane-aligned tiles; >=2 grid steps when batch spans >1 tile."""
    bp_min = _round_up(B, 128)                      # 128-lane alignment quantum
    n = pl.cdiv(bp_min, tb)
    if bp_min > 128:
        n = max(n, 2)                               # let v7x's 2 TCs both work
    TB = _round_up(pl.cdiv(bp_min, n), 128)
    return TB, n * TB, n


@functools.partial(jax.jit, static_argnames=("tb",))
def qnetwork_forward(x, params, *, tb=16384):
    """x: (B, INPUT_SIZE) float32 -> (B, OUTPUT_SIZE) float32."""
    w1, b1, w2, b2, w3, b3 = params                 # PyTorch layout: W (out, in)
    B = x.shape[0]
    TB, Bp, n_tiles = _choose_tiling(B, tb)

    # Transpose to batch-in-lanes and zero-pad the batch (padded rows are
    # sliced off below, so their relu(b1)-derived garbage never leaks out).
    xt = jnp.pad(x[:, 0], (0, Bp - B)).reshape(1, Bp)
    b1c = b1.reshape(HIDDEN, 1)
    b2c = b2.reshape(HIDDEN, 1)
    b3c = b3.reshape(OUTPUT_SIZE, 1)

    const = lambda a: pl.BlockSpec(a.shape, lambda i: (0,) * a.ndim)

    flops = 2 * Bp * (INPUT_SIZE * HIDDEN + HIDDEN * HIDDEN + HIDDEN * OUTPUT_SIZE)
    bytes_accessed = 4 * (
        Bp * (INPUT_SIZE + OUTPUT_SIZE)
        + HIDDEN * (INPUT_SIZE + HIDDEN + 2)
        + OUTPUT_SIZE * (HIDDEN + 1)
    )

    out_t = pl.pallas_call(
        qnetwork_kernel,
        out_shape=jax.ShapeDtypeStruct((OUTPUT_SIZE, Bp), jnp.float32),
        grid=(n_tiles,),
        in_specs=[
            pl.BlockSpec((1, TB), lambda i: (0, i)),   # streamed input tile
            const(w1), const(b1c),                     # VMEM-resident weights
            const(w2), const(b2c),
            const(w3), const(b3c),
        ],
        out_specs=pl.BlockSpec((OUTPUT_SIZE, TB), lambda i: (0, i)),
        compiler_params=pltpu.CompilerParams(
            dimension_semantics=("parallel",),         # megacore split on v7x
        ),
        cost_estimate=pl.CostEstimate(
            flops=flops, transcendentals=0, bytes_accessed=bytes_accessed
        ),
    )(xt, w1, b1c, w2, b2c, w3, b3c)

    # (4, Bp) -> (B, 4); tiny transpose handled by XLA outside the kernel.
    return out_t[:, :B].T


def init_params(key):
    """Deterministic init mimicking nn.Linear (W: (out, in), b: (out,))."""

    def linear(key, fan_in, fan_out):
        kw, kb = jax.random.split(key)
        bound = 1.0 / (fan_in ** 0.5)
        w = jax.random.uniform(kw, (fan_out, fan_in), jnp.float32, -bound, bound)
        b = jax.random.uniform(kb, (fan_out,), jnp.float32, -bound, bound)
        return w, b

    k1, k2, k3 = jax.random.split(key, 3)
    w1, b1 = linear(k1, INPUT_SIZE, HIDDEN)
    w2, b2 = linear(k2, HIDDEN, HIDDEN)
    w3, b3 = linear(k3, HIDDEN, OUTPUT_SIZE)
    return w1, b1, w2, b2, w3, b3


def qnetwork_reference(x, params):
    w1, b1, w2, b2, w3, b3 = params
    h1 = jnp.maximum(x @ w1.T + b1, 0.0)
    h2 = jnp.maximum(h1 @ w2.T + b2, 0.0)
    return h2 @ w3.T + b3


if __name__ == "__main__":
    key = jax.random.PRNGKey(0)
    kp, kx = jax.random.split(key)
    params = init_params(kp)

    # Small serving-style batch (module spec: input_size=1, output_size=4).
    batch = 8
    x = jax.random.normal(kx, (batch, INPUT_SIZE), jnp.float32)
    out = jax.block_until_ready(qnetwork_forward(x, params))
    ref = qnetwork_reference(x, params)
    assert out.shape == (batch, OUTPUT_SIZE)
    assert jnp.allclose(out, ref, atol=1e-5, rtol=1e-5)

    # Exercise the multi-tile / pipelined path (>=2 grid steps, non-divisible B).
    big = 4100
    xb = jax.random.normal(jax.random.PRNGKey(1), (big, INPUT_SIZE), jnp.float32)
    outb = jax.block_until_ready(qnetwork_forward(xb, params))
    refb = qnetwork_reference(xb, params)
    assert outb.shape == (big, OUTPUT_SIZE)
    assert jnp.allclose(outb, refb, atol=1e-4, rtol=1e-4)

    print("KERNEL_OK")
</pallas_src>

<mosaic_0001>
module attributes {stable_mosaic.version = 11 : i64} {
  func.func @qnetwork_kernel(%arg0: i32, %arg1: memref<1x128xf32, #tpu.memory_space<vmem>>, %arg2: memref<32x1xf32, #tpu.memory_space<vmem>>, %arg3: memref<32x1xf32, #tpu.memory_space<vmem>>, %arg4: memref<32x32xf32, #tpu.memory_space<vmem>>, %arg5: memref<32x1xf32, #tpu.memory_space<vmem>>, %arg6: memref<4x32xf32, #tpu.memory_space<vmem>>, %arg7: memref<4x1xf32, #tpu.memory_space<vmem>>, %arg8: memref<4x128xf32, #tpu.memory_space<vmem>>) attributes {dimension_semantics = [#tpu.dimension_semantics<parallel>], iteration_bounds = array<i64: 1>, scalar_prefetch = 0 : i64, scratch_operands = 0 : i64, tpu.core_type = #tpu.core_type<tc>, window_params = [{transform_indices = @transform_0, window_bounds = array<i64: 1, 128>}, {pipeline_mode = #tpu.pipeline_mode<synchronous>, transform_indices = @transform_1, window_bounds = array<i64: 32, 1>}, {pipeline_mode = #tpu.pipeline_mode<synchronous>, transform_indices = @transform_2, window_bounds = array<i64: 32, 1>}, {pipeline_mode = #tpu.pipeline_mode<synchronous>, transform_indices = @transform_3, window_bounds = array<i64: 32, 32>}, {pipeline_mode = #tpu.pipeline_mode<synchronous>, transform_indices = @transform_4, window_bounds = array<i64: 32, 1>}, {pipeline_mode = #tpu.pipeline_mode<synchronous>, transform_indices = @transform_5, window_bounds = array<i64: 4, 32>}, {pipeline_mode = #tpu.pipeline_mode<synchronous>, transform_indices = @transform_6, window_bounds = array<i64: 4, 1>}, {transform_indices = @transform_7, window_bounds = array<i64: 4, 128>}]} {
    %c0 = arith.constant 0 : index
    %c0_0 = arith.constant 0 : index
    %0 = vector.load %arg1[%c0, %c0_0] : memref<1x128xf32, #tpu.memory_space<vmem>>, vector<1x128xf32>
    %c0_1 = arith.constant 0 : index
    %c0_2 = arith.constant 0 : index
    %1 = vector.load %arg2[%c0_1, %c0_2] : memref<32x1xf32, #tpu.memory_space<vmem>>, vector<32x1xf32>
    %2 = vector.broadcast %1 : vector<32x1xf32> to vector<32x128xf32>
    %3 = vector.broadcast %0 : vector<1x128xf32> to vector<32x128xf32>
    %4 = arith.mulf %2, %3 : vector<32x128xf32>
    %c0_3 = arith.constant 0 : index
    %c0_4 = arith.constant 0 : index
    %5 = vector.load %arg3[%c0_3, %c0_4] : memref<32x1xf32, #tpu.memory_space<vmem>>, vector<32x1xf32>
    %6 = vector.broadcast %5 : vector<32x1xf32> to vector<32x128xf32>
    %7 = arith.addf %4, %6 : vector<32x128xf32>
    %cst = arith.constant 0.000000e+00 : f32
    %8 = vector.broadcast %cst : f32 to vector<32x128xf32>
    %9 = arith.maximumf %7, %8 : vector<32x128xf32>
    %c0_5 = arith.constant 0 : index
    %c0_6 = arith.constant 0 : index
    %10 = vector.load %arg4[%c0_5, %c0_6] : memref<32x32xf32, #tpu.memory_space<vmem>>, vector<32x32xf32>
    %cst_7 = arith.constant dense<0.000000e+00> : vector<32x128xf32>
    %11 = tpu.matmul %10, %9, %cst_7 {dimension_numbers = #tpu.dot_dimension_numbers<[1], [0], [0], [1], [0, 0, 1, 1], [], []>} : vector<32x32xf32>, vector<32x128xf32>, vector<32x128xf32> -> vector<32x128xf32>
    %c0_8 = arith.constant 0 : index
    %c0_9 = arith.constant 0 : index
    %12 = vector.load %arg5[%c0_8, %c0_9] : memref<32x1xf32, #tpu.memory_space<vmem>>, vector<32x1xf32>
    %13 = vector.broadcast %12 : vector<32x1xf32> to vector<32x128xf32>
    %14 = arith.addf %11, %13 : vector<32x128xf32>
    %cst_10 = arith.constant 0.000000e+00 : f32
    %15 = vector.broadcast %cst_10 : f32 to vector<32x128xf32>
    %16 = arith.maximumf %14, %15 : vector<32x128xf32>
    %c0_11 = arith.constant 0 : index
    %c0_12 = arith.constant 0 : index
    %17 = vector.load %arg6[%c0_11, %c0_12] : memref<4x32xf32, #tpu.memory_space<vmem>>, vector<4x32xf32>
    %cst_13 = arith.constant dense<0.000000e+00> : vector<4x128xf32>
    %18 = tpu.matmul %17, %16, %cst_13 {dimension_numbers = #tpu.dot_dimension_numbers<[1], [0], [0], [1], [0, 0, 1, 1], [], []>} : vector<4x32xf32>, vector<32x128xf32>, vector<4x128xf32> -> vector<4x128xf32>
    %c0_14 = arith.constant 0 : index
    %c0_15 = arith.constant 0 : index
    %19 = vector.load %arg7[%c0_14, %c0_15] : memref<4x1xf32, #tpu.memory_space<vmem>>, vector<4x1xf32>
    %20 = vector.broadcast %19 : vector<4x1xf32> to vector<4x128xf32>
    %21 = arith.addf %18, %20 : vector<4x128xf32>
    %c0_16 = arith.constant 0 : index
    %c0_17 = arith.constant 0 : index
    %22 = vector.load %arg8[%c0_16, %c0_17] : memref<4x128xf32, #tpu.memory_space<vmem>>, vector<4x128xf32>
    tpu.vector_store %arg8[%c0_16, %c0_17], %21 {strides = array<i32>} : memref<4x128xf32, #tpu.memory_space<vmem>>, vector<4x128xf32>,
    return
  }
  func.func @transform_0(%arg0: i32) -> (i32, i32) {
    %c0_i32 = arith.constant 0 : i32
    %c0_i32_0 = arith.constant 0 : i32
    return %c0_i32, %arg0 : i32, i32
  }
  func.func @transform_1(%arg0: i32) -> (i32, i32) {
    %c0_i32 = arith.constant 0 : i32
    %c0_i32_0 = arith.constant 0 : i32
    %c0_i32_1 = arith.constant 0 : i32
    return %c0_i32, %c0_i32_0 : i32, i32
  }
  func.func @transform_2(%arg0: i32) -> (i32, i32) {
    %c0_i32 = arith.constant 0 : i32
    %c0_i32_0 = arith.constant 0 : i32
    %c0_i32_1 = arith.constant 0 : i32
    return %c0_i32, %c0_i32_0 : i32, i32
  }
  func.func @transform_3(%arg0: i32) -> (i32, i32) {
    %c0_i32 = arith.constant 0 : i32
    %c0_i32_0 = arith.constant 0 : i32
    %c0_i32_1 = arith.constant 0 : i32
    return %c0_i32, %c0_i32_0 : i32, i32
  }
  func.func @transform_4(%arg0: i32) -> (i32, i32) {
    %c0_i32 = arith.constant 0 : i32
    %c0_i32_0 = arith.constant 0 : i32
    %c0_i32_1 = arith.constant 0 : i32
    return %c0_i32, %c0_i32_0 : i32, i32
  }
  func.func @transform_5(%arg0: i32) -> (i32, i32) {
    %c0_i32 = arith.constant 0 : i32
    %c0_i32_0 = arith.constant 0 : i32
    %c0_i32_1 = arith.constant 0 : i32
    return %c0_i32, %c0_i32_0 : i32, i32
  }
  func.func @transform_6(%arg0: i32) -> (i32, i32) {
    %c0_i32 = arith.constant 0 : i32
    %c0_i32_0 = arith.constant 0 : i32
    %c0_i32_1 = arith.constant 0 : i32
    return %c0_i32, %c0_i32_0 : i32, i32
  }
  func.func @transform_7(%arg0: i32) -> (i32, i32) {
    %c0_i32 = arith.constant 0 : i32
    %c0_i32_0 = arith.constant 0 : i32
    return %c0_i32, %arg0 : i32, i32
  }
}

</mosaic_0001>

<llo_original>
// kernel: qnetwork_forward.1
$region0: #{qnetwork_forward.1}
  #allocation0 [shape = 'u32[]', space=smem, size = 0x4, offset = 0x4, fixed_abs, tag = 'smem constant byte address 0x4 - core index']
  #allocation1 [shape = 'u32[72,128]{1,0:T(1,128)}', space=vmem, size = 0x9000, scoped, tag = 'internal scratch']
  %s0 = inlined_call_operand.vmem [shape: f32[1,128], index: 0, kind: input, shape index: {}]
  %s1 = inlined_call_operand.vmem [shape: f32[32,1], index: 1, kind: input, shape index: {}]
  %s2 = inlined_call_operand.vmem [shape: f32[32,1], index: 2, kind: input, shape index: {}]
  %s3 = inlined_call_operand.vmem [shape: f32[32,32], index: 3, kind: input, shape index: {}]
  %s4 = inlined_call_operand.vmem [shape: f32[32,1], index: 4, kind: input, shape index: {}]
  %s5 = inlined_call_operand.vmem [shape: f32[4,32], index: 5, kind: input, shape index: {}]
  %s6 = inlined_call_operand.vmem [shape: f32[4,1], index: 6, kind: input, shape index: {}]
  %s7 = inlined_call_operand.vmem [shape: f32[4,128], index: 7, kind: output, shape index: {}]
  %s8 = sld [smem:[#allocation0]]
  $region38: #{qnetwork_forward.1} parent=0
    _
  %s10 = ssub.s32 1, %s8
  %s11 = scalar_select 0, %s10, %s8
  // Predicated region
  $region2: #{qnetwork_forward.1} parent=0 // pred_check
    _
  $region3: #{qnetwork_forward.1} parent=0 // pred_check_branch
    %13 = sbr.rel (0) target = $region5
  $region4: #{qnetwork_forward.1} parent=0 // pred_region
    _
  $region5: #{qnetwork_forward.1} parent=0 // pred_fallthru
    _
  // Predicated region
  $region6: #{qnetwork_forward.1} parent=0 // pred_check
    _
  $region7: #{qnetwork_forward.1} parent=0 // pred_check_branch
    %15 = sbr.rel (0) target = $region9
  $region8: #{qnetwork_forward.1} parent=0 // pred_region
    _
  $region9: #{qnetwork_forward.1} parent=0 // pred_fallthru
    _
  // Predicated region
  $region10: #{qnetwork_forward.1} parent=0 // pred_check
    _
  $region11: #{qnetwork_forward.1} parent=0 // pred_check_branch
    %17 = sbr.rel (0) target = $region13
  $region12: #{qnetwork_forward.1} parent=0 // pred_region
    _
  $region13: #{qnetwork_forward.1} parent=0 // pred_fallthru
    _
  // Predicated region
  $region14: #{qnetwork_forward.1} parent=0 // pred_check
    _
  $region15: #{qnetwork_forward.1} parent=0 // pred_check_branch
    %19 = sbr.rel (0) target = $region17
  $region16: #{qnetwork_forward.1} parent=0 // pred_region
    _
  $region17: #{qnetwork_forward.1} parent=0 // pred_fallthru
    _
  // Predicated region
  $region18: #{qnetwork_forward.1} parent=0 // pred_check
    _
  $region19: #{qnetwork_forward.1} parent=0 // pred_check_branch
    %21 = sbr.rel (0) target = $region21
  $region20: #{qnetwork_forward.1} parent=0 // pred_region
    _
  $region21: #{qnetwork_forward.1} parent=0 // pred_fallthru
    _
  // Predicated region
  $region22: #{qnetwork_forward.1} parent=0 // pred_check
    _
  $region23: #{qnetwork_forward.1} parent=0 // pred_check_branch
    %23 = sbr.rel (0) target = $region25
  $region24: #{qnetwork_forward.1} parent=0 // pred_region
    _
  $region25: #{qnetwork_forward.1} parent=0 // pred_fallthru
    _
  // Predicated region
  $region26: #{qnetwork_forward.1} parent=0 // pred_check
    _
  $region27: #{qnetwork_forward.1} parent=0 // pred_check_branch
    %25 = sbr.rel (0) target = $region29
  $region28: #{qnetwork_forward.1} parent=0 // pred_region
    _
  $region29: #{qnetwork_forward.1} parent=0 // pred_fallthru
    _
  %v26 = vld [vmem:[%s0] sm:$0x1]
  %v27 = vld [vmem:[%s1] sm:$0xff]
  %v28 = vld [vmem:[%s1 + $0x8] sm:$0xff]
  %v29 = vld [vmem:[%s1 + $0x10] sm:$0xff]
  %v30 = vld [vmem:[%s1 + $0x18] sm:$0xff]
  %32 = vset.pattern.permute.xlu0 0
  %33 = vperm.xlu0 %32, %v27
  %v34 = vpop.permute.xlu0 %33
  %37 = vset.pattern.permute.xlu0 0
  %38 = vperm.xlu0 %37, %v28
  %v39 = vpop.permute.xlu0 %38
  %42 = vset.pattern.permute.xlu0 0
  %43 = vperm.xlu0 %42, %v29
  %v44 = vpop.permute.xlu0 %43
  %47 = vset.pattern.permute.xlu0 0
  %48 = vperm.xlu0 %47, %v30
  %v49 = vpop.permute.xlu0 %48
  %v52 = vperm.slane %v26, 0
  %v54 = vmul.f32 %v34, %v52
  %v55 = vmul.f32 %v39, %v52
  %v56 = vmul.f32 %v44, %v52
  %v57 = vmul.f32 %v49, %v52
  %v58 = vld [vmem:[%s2] sm:$0xff]
  %v59 = vld [vmem:[%s2 + $0x8] sm:$0xff]
  %v60 = vld [vmem:[%s2 + $0x10] sm:$0xff]
  %v61 = vld [vmem:[%s2 + $0x18] sm:$0xff]
  %63 = vset.pattern.permute.xlu0 0
  %64 = vperm.xlu0 %63, %v58
  %v65 = vpop.permute.xlu0 %64
  %68 = vset.pattern.permute.xlu0 0
  %69 = vperm.xlu0 %68, %v59
  %v70 = vpop.permute.xlu0 %69
  %73 = vset.pattern.permute.xlu0 0
  %74 = vperm.xlu0 %73, %v60
  %v75 = vpop.permute.xlu0 %74
  %78 = vset.pattern.permute.xlu0 0
  %79 = vperm.xlu0 %78, %v61
  %v80 = vpop.permute.xlu0 %79
  %v82 = vadd.f32 %v54, %v65
  %v83 = vadd.f32 %v55, %v70
  %v84 = vadd.f32 %v56, %v75
  %v85 = vadd.f32 %v57, %v80
  %v86 = vmax.f32 %v82, 0.0
  %v87 = vmax.f32 %v83, 0.0
  %v88 = vmax.f32 %v84, 0.0
  %v89 = vmax.f32 %v85, 0.0
  %v90 = vld [vmem:[%s3] sm:$0xff]
  %v91 = vld [vmem:[%s3 + $0x8] sm:$0xff]
  %v92 = vld [vmem:[%s3 + $0x10] sm:$0xff]
  %v93 = vld [vmem:[%s3 + $0x18] sm:$0xff]
  %v94 = vld [vmem:[%s4] sm:$0xff]
  %v95 = vld [vmem:[%s4 + $0x8] sm:$0xff]
  %v96 = vld [vmem:[%s4 + $0x10] sm:$0xff]
  %v97 = vld [vmem:[%s4 + $0x18] sm:$0xff]
  %99 = vset.pattern.permute.xlu0 0
  %100 = vperm.xlu0 %99, %v94
  %v101 = vpop.permute.xlu0 %100
  %104 = vset.pattern.permute.xlu0 0
  %105 = vperm.xlu0 %104, %v95
  %v106 = vpop.permute.xlu0 %105
  %109 = vset.pattern.permute.xlu0 0
  %110 = vperm.xlu0 %109, %v96
  %v111 = vpop.permute.xlu0 %110
  %114 = vset.pattern.permute.xlu0 0
  %115 = vperm.xlu0 %114, %v97
  %v116 = vpop.permute.xlu0 %115
  %vm118 = vcmask 261120
  %v120 = vsel %vm118, %v90, 0
  %v123 = vsel %vm118, %v91, 0
  %v126 = vsel %vm118, %v92, 0
  %v129 = vsel %vm118, %v93, 0
  %131 = vmatpush.msra.mxu0 0.0
  %132 = vmatpush.msra.mxu0 0.0
  %133 = vmatpush.msra.mxu0 0.0
  %134 = vmatpush.msra.mxu0 0.0
  %135 = vmatpush.msra.mxu0 0.0
  %136 = vmatpush.msra.mxu0 0.0
  %137 = vmatpush.msra.mxu0 0.0
  %138 = vmatpush.msra.mxu0 0.0
  %139 = vmatpush.msra.mxu0 0.0
  %140 = vmatpush.msra.mxu0 0.0
  %141 = vmatpush.msra.mxu0 0.0
  %142 = vmatpush.msra.mxu0 0.0
  %143 = vmatpush.msra.mxu0 %v89
  %144 = vmatpush.msra.mxu0 %v88
  %145 = vmatpush.msra.mxu0 %v87
  %146 = vmatpush.msra.mxu0 %v86
  %147 = vmatmul.f32.gmra.mxu0 %v120
  %v148 = vpop.f32.mrf.mxu0
  %v149 = vadd.f32 %v101, %v148
  %150 = vmatmul.f32.gmra.mxu0 %v123
  %v151 = vpop.f32.mrf.mxu0
  %v152 = vadd.f32 %v106, %v151
  %153 = vmatmul.f32.gmra.mxu0 %v126
  %v154 = vpop.f32.mrf.mxu0
  %v155 = vadd.f32 %v111, %v154
  %156 = vmatmul.f32.gmra.mxu0 %v129
  %v157 = vpop.f32.mrf.mxu0
  %v158 = vadd.f32 %v116, %v157
  %159 = vdwg.mxu0
  %v160 = vmax.f32 %v149, 0.0
  %v161 = vmax.f32 %v152, 0.0
  %v162 = vmax.f32 %v155, 0.0
  %v163 = vmax.f32 %v158, 0.0
  %v164 = vld [vmem:[%s5] sm:$0xf]
  %v165 = vld [vmem:[%s6] sm:$0xf]
  %167 = vset.pattern.permute.xlu0 0
  %168 = vperm.xlu0 %167, %v165
  %v169 = vpop.permute.xlu0 %168
  %v172 = vsel %vm118, %v164, 0
  %174 = vmatpush.msra.mxu0 0.0
  %175 = vmatpush.msra.mxu0 0.0
  %176 = vmatpush.msra.mxu0 0.0
  %177 = vmatpush.msra.mxu0 0.0
  %178 = vmatpush.msra.mxu0 0.0
  %179 = vmatpush.msra.mxu0 0.0
  %180 = vmatpush.msra.mxu0 0.0
  %181 = vmatpush.msra.mxu0 0.0
  %182 = vmatpush.msra.mxu0 0.0
  %183 = vmatpush.msra.mxu0 0.0
  %184 = vmatpush.msra.mxu0 0.0
  %185 = vmatpush.msra.mxu0 0.0
  %186 = vmatpush.msra.mxu0 %v163
  %187 = vmatpush.msra.mxu0 %v162
  %188 = vmatpush.msra.mxu0 %v161
  %189 = vmatpush.msra.mxu0 %v160
  %190 = vmatmul.f32.gmra.mxu0 %v172
  %v191 = vpop.f32.mrf.mxu0
  %v192 = vadd.f32 %v169, %v191
  %193 = vdwg.mxu0
  %194 = vst [vmem:[%s7] sm:$0xf] %v192
  // Predicated region
  $region30: #{qnetwork_forward.1} parent=0 // pred_check
    _
  $region31: #{qnetwork_forward.1} parent=0 // pred_check_branch
    %196 = sbr.rel (0) target = $region33
  $region32: #{qnetwork_forward.1} parent=0 // pred_region
    _
  $region33: #{qnetwork_forward.1} parent=0 // pred_fallthru
    _
  // Predicated region
  $region34: #{qnetwork_forward.1} parent=0 // pred_check
    _
  $region35: #{qnetwork_forward.1} parent=0 // pred_check_branch
    %198 = sbr.rel (0) target = $region37
  $region36: #{qnetwork_forward.1} parent=0 // pred_region
    _
  $region37: #{qnetwork_forward.1} parent=0 // pred_fallthru
    _

</llo_original>
